<compile_context>
chip_gen: v7x
topology: tpu7x:2x2x1
jax: 0.10.0
libtpu: 0.0.40
codegen_flags: <defaults>
</compile_context>

<pallas_src>
import functools

import jax
import jax.numpy as jnp
from jax import lax
from jax.experimental import pallas as pl
from jax.experimental.pallas import tpu as pltpu

LANES = 128
BN_EPS = 1e-5


def _round_up(x, m):
    return ((x + m - 1) // m) * m


@functools.lru_cache()
def _vmem_limit_bytes():
    """Generation-aware scoped-VMEM limit: ~48 MiB on 64-MiB parts (v7x), ~96 MiB on
    128-MiB parts (v5e/v6e).  Falls back to 48 MiB if the query is unavailable."""
    try:
        info = pltpu.get_tpu_info()
        cap = int(getattr(info, "vmem_capacity_bytes", 64 * 1024 * 1024))
    except Exception:
        cap = 64 * 1024 * 1024
    return min((cap * 3) // 4, 100 * 1024 * 1024)


def _pick_tile_h(h, bytes_per_row, vmem_budget):
    """Largest row tile dividing h whose double-buffered blocks fit the budget,
    preferring >= 2 row tiles (pipelining + v7x megacore sharding)."""
    divisors = [t for t in (512, 256, 128, 64, 32, 16, 8) if t <= h and h % t == 0]
    for t in divisors:
        if 2 * t * bytes_per_row <= vmem_budget and h // t >= 2:
            return t
    for t in divisors:
        if 2 * t * bytes_per_row <= vmem_budget:
            return t
    return divisors[-1] if divisors else h


def _fold_bn(stats, gamma, beta, count, cpad):
    """Reduce per-tile (sum, sumsq) stats and fold train-mode BN into (scale, shift)."""
    tot = jnp.sum(stats, axis=(0, 1))                           # (2, cpad)
    mean = tot[0] / count
    var = jnp.maximum(tot[1] / count - mean * mean, 0.0)        # clamp f32 cancellation
    # TODO(synk): for very large N*H*W, merge per-tile (mean, M2) Welford-style instead
    # of raw sum/sumsq to avoid f32 cancellation.
    c_out = gamma.shape[0]
    g = jnp.pad(gamma.astype(jnp.float32), (0, cpad - c_out))
    b = jnp.pad(beta.astype(jnp.float32), (0, cpad - c_out))
    inv = lax.rsqrt(var + BN_EPS)
    scale = g * inv
    shift = b - mean * scale
    return scale, shift                                         # (cpad,) f32 each


# --------------------------------- Pallas kernels -----------------------------------


def _branch_conv_kernel(*refs, taps, th, w_img, cin, cpad, has_halo, collapse):
    """Pass 1 of a pyramid branch: dilated conv as MXU matmul(s) over the kernel taps,
    plus per-tile channel (sum, sum-of-squares).  The BN affine + ReLU are fused into
    the consumer (concat-conv) kernel, so the pre-BN activation makes exactly one HBM
    round trip, stored lane-dense at cpad channels."""
    if has_halo:
        x_ref, halo_ref, w_ref, y_ref, stats_ref = refs
        x = jnp.concatenate([x_ref[0], halo_ref[0, 0]], axis=0)   # (th + 2d, Wp, Cin)
    else:
        x_ref, w_ref, y_ref, stats_ref = refs
        x = x_ref[0]                                              # (th, W, Cin)
    rows = th * w_img

    if collapse:
        # Single big-K matmul (K = T*Cin); lane-concat chunks are 128-aligned here.
        if len(taps) == 1:
            lhs = x.reshape(rows, cin)
        else:
            lhs = jnp.concatenate(
                [x[r:r + th, c:c + w_img, :] for (r, c) in taps], axis=-1
            ).reshape(rows, len(taps) * cin)
        acc = jnp.dot(lhs, w_ref[...], preferred_element_type=jnp.float32)
    else:
        # Cin not lane-aligned: accumulate one matmul per tap (unaligned minor-dim
        # concatenation is not reliably lowered, so the big-K collapse is reserved for
        # Cin % 128 == 0, i.e. realistic ASPP channel counts).
        acc = None
        for t, (r, c) in enumerate(taps):
            xt = x[r:r + th, c:c + w_img, :].reshape(rows, cin)
            part = jnp.dot(xt, w_ref[t], preferred_element_type=jnp.float32)
            acc = part if acc is None else acc + part             # (rows, cpad) f32

    y_ref[0] = acc.reshape(th, w_img, cpad).astype(y_ref.dtype)

    # Channel sum / sumsq on the (otherwise idle) MXU instead of VPU + cross-sublane
    # XLU reductions; stats come from the f32 accumulator, not the stored dtype.
    ones = jnp.ones((8, rows), jnp.float32)
    s = jnp.dot(ones, acc, preferred_element_type=jnp.float32)[0:1, :]
    sq = jnp.dot(ones, acc * acc, preferred_element_type=jnp.float32)[0:1, :]
    stats_ref[0, 0] = jnp.concatenate([s, sq], axis=0)            # (2, cpad)


def _concat_conv_kernel(*refs, nb, th, w_img, cpad, matmul_dtype):
    """Concat conv (1x1) with the per-branch BatchNorm affine + ReLU fused in:
    relu(y_b*scale_b + shift_b) is applied to each loaded pre-BN branch tile, the
    activations are lane-concatenated (128-aligned) into one big-K LHS, and the
    spatially-constant GAP-branch contribution enters as a per-sample bias added before
    the stats.  Emits the pre-BN concat-conv output plus its per-tile channel stats."""
    y_refs = refs[:nb]
    scale_ref, shift_ref, gapb_ref, wcat_ref, ycat_ref, stats_ref = refs[nb:]
    rows = th * w_img

    sfull = scale_ref[...]                                        # (1, nb*cpad) f32
    tfull = shift_ref[...]
    acts = []
    for b in range(nb):
        yb = y_refs[b][0].reshape(rows, cpad).astype(jnp.float32)
        sb = sfull[:, b * cpad:(b + 1) * cpad]
        tb = tfull[:, b * cpad:(b + 1) * cpad]
        acts.append(jnp.maximum(yb * sb + tb, 0.0).astype(matmul_dtype))
    lhs = acts[0] if nb == 1 else jnp.concatenate(acts, axis=-1)  # (rows, nb*cpad)

    acc = jnp.dot(lhs, wcat_ref[...], preferred_element_type=jnp.float32)
    acc = acc + gapb_ref[0]                                       # per-sample GAP bias
    cpo = acc.shape[-1]
    ycat_ref[0] = acc.reshape(th, w_img, cpo).astype(ycat_ref.dtype)

    ones = jnp.ones((8, rows), jnp.float32)
    s = jnp.dot(ones, acc, preferred_element_type=jnp.float32)[0:1, :]
    sq = jnp.dot(ones, acc * acc, preferred_element_type=jnp.float32)[0:1, :]
    stats_ref[0, 0] = jnp.concatenate([s, sq], axis=0)            # (2, cpo)


def _bn_relu_kernel(y_ref, scale_ref, shift_ref, o_ref):
    """Final BatchNorm affine + ReLU of the concat conv (module output)."""
    y = y_ref[0].astype(jnp.float32)
    o_ref[0] = jnp.maximum(y * scale_ref[...] + shift_ref[...], 0.0).astype(o_ref.dtype)


# ------------------------------ pallas_call wrappers ---------------------------------


def conv_branch(x_nhwc, weight, gamma, beta, *, dilation=1, matmul_dtype=jnp.bfloat16):
    """Conv2d (k in {1,3}, stride 1, 'same', no bias) of one pyramid branch.

    Returns (y, scale, shift):
      y            : (N, H, W, cpad) pre-BN conv output, lane-padded, stored in
                     `matmul_dtype` (bf16 by default; stats are f32-exact regardless).
      scale, shift : (cpad,) f32 folded train-mode BatchNorm2d affine; the consumer
                     applies relu(y*scale + shift).
    """
    N, H, W, C_in = x_nhwc.shape
    C_out, _, KH, KW = weight.shape
    assert KH == KW and KH in (1, 3), "only 1x1 / 3x3 convs appear in this module"
    d = int(dilation)
    cpad = _round_up(C_out, LANES)
    isz = jnp.dtype(matmul_dtype).itemsize
    vmem_limit = _vmem_limit_bytes()

    if KH == 1:
        taps = ((0, 0),)
        Wp = W
    else:
        taps = tuple((kh * d, kw * d) for kh in range(3) for kw in range(3))
        Wp = W + 2 * d
    T = len(taps)
    collapse = (T == 1) or (C_in % LANES == 0)

    wt = jnp.transpose(weight, (2, 3, 1, 0))                      # (KH, KW, Cin, Cout)
    w = wt.reshape(T * C_in, C_out) if collapse else wt.reshape(T, C_in, C_out)
    w = jnp.pad(w, ((0, 0),) * (w.ndim - 1) + ((0, cpad - C_out),)).astype(matmul_dtype)

    # input tile + y tile (store dtype) + f32 accumulator, per output row.
    row_bytes = Wp * C_in * isz + W * cpad * isz + W * cpad * 4
    th = _pick_tile_h(H, row_bytes, vmem_limit // 2)
    nh = H // th
    grid = (N, nh)

    inputs, in_specs = [], []
    if KH == 3:
        x_p = jnp.pad(x_nhwc.astype(matmul_dtype), ((0, 0), (d, d), (d, d), (0, 0)))
        # Main tiles index the padded input directly; only a small 2d-row halo below
        # each tile is pre-gathered, so input HBM->VMEM traffic is (1 + 2d/TH)x, not 2x.
        halo = jnp.stack(
            [x_p[:, (h + 1) * th:(h + 1) * th + 2 * d] for h in range(nh)], axis=1)
        inputs += [x_p, halo]
        in_specs += [
            pl.BlockSpec((1, th, Wp, C_in), lambda n, h: (n, h, 0, 0)),
            pl.BlockSpec((1, 1, 2 * d, Wp, C_in), lambda n, h: (n, h, 0, 0, 0)),
        ]
    else:
        inputs.append(x_nhwc.astype(matmul_dtype))
        in_specs.append(pl.BlockSpec((1, th, W, C_in), lambda n, h: (n, h, 0, 0)))
    inputs.append(w)
    in_specs.append(pl.BlockSpec(
        w.shape, (lambda n, h: (0, 0, 0)) if w.ndim == 3 else (lambda n, h: (0, 0))))

    kernel = functools.partial(_branch_conv_kernel, taps=taps, th=th, w_img=W, cin=C_in,
                               cpad=cpad, has_halo=(KH == 3), collapse=collapse)
    flops = 2 * N * H * W * T * C_in * cpad
    bytes_accessed = (sum(int(a.size) * int(jnp.dtype(a.dtype).itemsize) for a in inputs)
                      + N * H * W * cpad * isz + N * nh * 2 * cpad * 4)

    y, stats = pl.pallas_call(
        kernel,
        grid=grid,
        in_specs=in_specs,
        out_specs=[
            pl.BlockSpec((1, th, W, cpad), lambda n, h: (n, h, 0, 0)),
            pl.BlockSpec((1, 1, 2, cpad), lambda n, h: (n, h, 0, 0)),
        ],
        out_shape=[
            jax.ShapeDtypeStruct((N, H, W, cpad), matmul_dtype),
            jax.ShapeDtypeStruct((N, nh, 2, cpad), jnp.float32),
        ],
        compiler_params=pltpu.CompilerParams(
            dimension_semantics=("parallel", "parallel"),
            vmem_limit_bytes=vmem_limit),
        cost_estimate=pl.CostEstimate(flops=flops, transcendentals=0,
                                      bytes_accessed=int(bytes_accessed)),
    )(*inputs)

    scale, shift = _fold_bn(stats, gamma, beta, float(N * H * W), cpad)
    return y, scale, shift


def concat_conv(branch_ys, scale_flat, shift_flat, gap_bias, wcat, gamma, beta, *,
                matmul_dtype=jnp.bfloat16):
    """Fused (branch BN+ReLU) -> 1x1 concat conv -> per-tile stats."""
    nb = len(branch_ys)
    N, H, W, cpad = branch_ys[0].shape
    cpo = wcat.shape[1]
    isz = jnp.dtype(branch_ys[0].dtype).itemsize
    vmem_limit = _vmem_limit_bytes()

    row_bytes = nb * W * cpad * isz + W * cpo * isz + W * cpo * 4
    th = _pick_tile_h(H, row_bytes, vmem_limit // 2)
    nh = H // th
    grid = (N, nh)

    in_specs = [pl.BlockSpec((1, th, W, cpad), lambda n, h: (n, h, 0, 0))
                for _ in range(nb)]
    in_specs += [
        pl.BlockSpec((1, nb * cpad), lambda n, h: (0, 0)),
        pl.BlockSpec((1, nb * cpad), lambda n, h: (0, 0)),
        pl.BlockSpec((1, 1, cpo), lambda n, h: (n, 0, 0)),
        pl.BlockSpec(wcat.shape, lambda n, h: (0, 0)),
    ]
    kernel = functools.partial(_concat_conv_kernel, nb=nb, th=th, w_img=W, cpad=cpad,
                               matmul_dtype=matmul_dtype)
    flops = 2 * N * H * W * nb * cpad * cpo
    bytes_accessed = (nb * N * H * W * cpad * isz + int(wcat.size) * isz
                      + N * H * W * cpo * isz + N * nh * 2 * cpo * 4)

    ycat, stats = pl.pallas_call(
        kernel,
        grid=grid,
        in_specs=in_specs,
        out_specs=[
            pl.BlockSpec((1, th, W, cpo), lambda n, h: (n, h, 0, 0)),
            pl.BlockSpec((1, 1, 2, cpo), lambda n, h: (n, h, 0, 0)),
        ],
        out_shape=[
            jax.ShapeDtypeStruct((N, H, W, cpo), branch_ys[0].dtype),
            jax.ShapeDtypeStruct((N, nh, 2, cpo), jnp.float32),
        ],
        compiler_params=pltpu.CompilerParams(
            dimension_semantics=("parallel", "parallel"),
            vmem_limit_bytes=vmem_limit),
        cost_estimate=pl.CostEstimate(flops=flops, transcendentals=0,
                                      bytes_accessed=int(bytes_accessed)),
    )(*branch_ys, scale_flat, shift_flat, gap_bias, wcat)

    scale, shift = _fold_bn(stats, gamma, beta, float(N * H * W), cpo)
    return ycat, scale, shift


def bn_relu_pass(y, scale, shift):
    """Streaming y*scale + shift -> ReLU (only used for the module's final output)."""
    N, H, W, cpad = y.shape
    isz = jnp.dtype(y.dtype).itemsize
    th = _pick_tile_h(H, W * cpad * (isz + 4), _vmem_limit_bytes() // 2)
    nh = H // th
    return pl.pallas_call(
        _bn_relu_kernel,
        grid=(N, nh),
        in_specs=[
            pl.BlockSpec((1, th, W, cpad), lambda n, h: (n, h, 0, 0)),
            pl.BlockSpec((1, cpad), lambda n, h: (0, 0)),
            pl.BlockSpec((1, cpad), lambda n, h: (0, 0)),
        ],
        out_specs=pl.BlockSpec((1, th, W, cpad), lambda n, h: (n, h, 0, 0)),
        out_shape=jax.ShapeDtypeStruct((N, H, W, cpad), jnp.float32),
        compiler_params=pltpu.CompilerParams(
            dimension_semantics=("parallel", "parallel"),
            vmem_limit_bytes=_vmem_limit_bytes()),
    )(y, scale.reshape(1, cpad), shift.reshape(1, cpad))


# ---------------------------- SpatialPoolingPyramid ---------------------------------


def spatial_pooling_pyramid(x_nchw, params, dilations, *, matmul_dtype=jnp.bfloat16):
    """Forward pass of SpatialPoolingPyramid (drop_layer=None -> Passthrough)."""
    x = jnp.transpose(x_nchw, (0, 2, 3, 1)).astype(jnp.float32)   # NHWC f32
    N, H, W, C_in = x.shape
    Cp = params["pool0_w"].shape[0]
    cpad = _round_up(Cp, LANES)
    cpo = _round_up(params["cat_w"].shape[0], LANES)
    nb_total = len(dilations) + 2
    nb = nb_total - 1                                             # spatial branches

    # Spatial branches: conv -> (pre-BN y, folded BN scale/shift).  Their BN + ReLU is
    # fused into the concat-conv kernel, so no per-branch activation round trip.
    ys, scales, shifts = [], [], []
    specs = [("pool0", 1)] + [(f"dil{i}", d) for i, d in enumerate(dilations)]
    for name, d in specs:
        y, s, t = conv_branch(x, params[name + "_w"], params[name + "_g"],
                              params[name + "_b"], dilation=d, matmul_dtype=matmul_dtype)
        ys.append(y); scales.append(s); shifts.append(t)
    scale_flat = jnp.stack(scales, axis=0).reshape(1, nb * cpad)
    shift_flat = jnp.stack(shifts, axis=0).reshape(1, nb * cpad)

    # GAP branch entirely in f32 JAX (trivially small; keeping it f32 avoids bf16 noise
    # being amplified by the tiny-batch BN).  AdaptiveAvgPool2d((1,1)) == spatial mean;
    # bilinear upsample of a 1x1 map with align_corners=True is a broadcast, and since
    # the concat conv is 1x1 the GAP contribution is spatially constant -> it enters the
    # concat-conv kernel as a per-sample bias instead of an (N,H,W,Cp) broadcast.
    gap_in = jnp.mean(x, axis=(1, 2))                             # (N, C_in)
    gap_pre = gap_in @ params["gap_w"][:, :, 0, 0].T              # (N, Cp)
    gmean = jnp.mean(gap_pre, axis=0)
    gvar = jnp.mean((gap_pre - gmean) ** 2, axis=0)
    gact = jnp.maximum((gap_pre - gmean) * lax.rsqrt(gvar + BN_EPS) * params["gap_g"]
                       + params["gap_b"], 0.0)                    # (N, Cp)

    wcat_full = params["cat_w"][:, :, 0, 0]                       # (Cp_out, nb_total*Cp)
    Cpo_real = wcat_full.shape[0]
    gap_bias = gact @ wcat_full[:, nb * Cp:].T                    # (N, Cp_out)
    gap_bias = jnp.pad(gap_bias, ((0, 0), (0, cpo - Cpo_real))).reshape(N, 1, cpo)

    # Concat-conv weight stacked per branch; rows for the padded activation channels are
    # zero (and the padded activations themselves are exactly zero), so feeding the
    # cpad-wide branch tensors is exact -- no per-branch :Cp slice, no concat in HBM.
    wcat_blocks = []
    for b in range(nb):
        wb = wcat_full[:, b * Cp:(b + 1) * Cp].T                  # (Cp, Cp_out)
        wcat_blocks.append(jnp.pad(wb, ((0, cpad - Cp), (0, cpo - Cpo_real))))
    wcat = jnp.concatenate(wcat_blocks, axis=0).astype(matmul_dtype)  # (nb*cpad, cpo)
    # NOTE: concat_conv's Conv2d bias is cancelled exactly by the train-mode BN -> dropped.

    ycat, cat_scale, cat_shift = concat_conv(
        ys, scale_flat, shift_flat, gap_bias, wcat,
        params["cat_g"], params["cat_b"], matmul_dtype=matmul_dtype)

    out = bn_relu_pass(ycat, cat_scale, cat_shift)                # (N, H, W, cpo) f32
    # dropout == Passthrough
    return jnp.transpose(out[..., :Cpo_real], (0, 3, 1, 2))       # back to NCHW


# ------------------------------------ reference -------------------------------------


def _reference(x_nchw, params, cat_bias, dilations):
    """Pure-JAX/XLA reference implementing the PyTorch module exactly (f32)."""
    x = x_nchw.astype(jnp.float32)

    def cbr(x, w, g, b, dilation=1, bias=None):
        k = w.shape[2]
        pad = dilation * (k - 1) // 2
        y = lax.conv_general_dilated(
            x, w.astype(jnp.float32), window_strides=(1, 1),
            padding=((pad, pad), (pad, pad)), rhs_dilation=(dilation, dilation),
            dimension_numbers=("NCHW", "OIHW", "NCHW"))
        if bias is not None:
            y = y + bias.reshape(1, -1, 1, 1)
        mean = jnp.mean(y, axis=(0, 2, 3), keepdims=True)
        var = jnp.mean((y - mean) ** 2, axis=(0, 2, 3), keepdims=True)
        y = (y - mean) * lax.rsqrt(var + BN_EPS)
        y = y * g.reshape(1, -1, 1, 1) + b.reshape(1, -1, 1, 1)
        return jnp.maximum(y, 0.0)

    branches = [cbr(x, params["pool0_w"], params["pool0_g"], params["pool0_b"])]
    for i, d in enumerate(dilations):
        branches.append(cbr(x, params[f"dil{i}_w"], params[f"dil{i}_g"],
                            params[f"dil{i}_b"], dilation=d))
    gap = cbr(jnp.mean(x, axis=(2, 3), keepdims=True),
              params["gap_w"], params["gap_g"], params["gap_b"])
    N, _, H, W = x.shape
    branches.append(jnp.broadcast_to(gap, (N, gap.shape[1], H, W)))
    cat = jnp.concatenate(branches, axis=1)
    return cbr(cat, params["cat_w"], params["cat_g"], params["cat_b"], bias=cat_bias)


# -------------------------------------- main ----------------------------------------


if __name__ == "__main__":
    # Small config consistent with the module: SpatialPoolingPyramid(input_channels=4,
    # dilations=(1, 2), output_pooling_channels=32) on a (2, 4, 16, 16) input.
    N, C_in, H, W = 2, 4, 16, 16
    Cp = 32
    dilations = (1, 2)
    n_branches = len(dilations) + 2

    key = jax.random.PRNGKey(0)
    ks = jax.random.split(key, 7)

    def kaiming(k, shape):                     # kaiming_normal_: fan_in, gain sqrt(2)
        fan_in = shape[1] * shape[2] * shape[3]
        return ((2.0 / fan_in) ** 0.5) * jax.random.normal(k, shape, dtype=jnp.float32)

    params = {
        "pool0_w": kaiming(ks[0], (Cp, C_in, 1, 1)),
        "dil0_w": kaiming(ks[1], (Cp, C_in, 3, 3)),
        "dil1_w": kaiming(ks[2], (Cp, C_in, 3, 3)),
        "gap_w": kaiming(ks[3], (Cp, C_in, 1, 1)),
        "cat_w": kaiming(ks[4], (Cp, n_branches * Cp, 1, 1)),
    }
    for name in ("pool0", "dil0", "dil1", "gap", "cat"):
        params[name + "_g"] = jnp.ones((Cp,), jnp.float32)    # BN weight <- 1
        params[name + "_b"] = jnp.zeros((Cp,), jnp.float32)   # BN bias   <- 0
    # concat_conv's Conv2d bias (default PyTorch init); it is cancelled by the
    # train-mode BN, so it only appears in the reference path.
    bound = 1.0 / ((n_branches * Cp) ** 0.5)
    cat_bias = jax.random.uniform(ks[5], (Cp,), minval=-bound, maxval=bound,
                                  dtype=jnp.float32)

    x = jax.random.normal(ks[6], (N, C_in, H, W), dtype=jnp.float32)

    ref = jax.block_until_ready(_reference(x, params, cat_bias, dilations))

    # Default path: bf16 MXU operands + bf16 intermediates (f32 accumulation / stats).
    out_bf16 = jax.block_until_ready(spatial_pooling_pyramid(x, params, dilations))
    assert out_bf16.shape == (N, Cp, H, W), out_bf16.shape
    err_bf16 = float(jnp.max(jnp.abs(out_bf16 - ref)))
    assert err_bf16 < 0.2, err_bf16

    # f32 path for a tight numerical check against the reference.
    out_f32 = jax.block_until_ready(
        spatial_pooling_pyramid(x, params, dilations, matmul_dtype=jnp.float32))
    assert bool(jnp.allclose(out_f32, ref, atol=1e-3, rtol=1e-3)), \
        float(jnp.max(jnp.abs(out_f32 - ref)))

    print("KERNEL_OK")
</pallas_src>

<mosaic_0001>
module attributes {stable_mosaic.version = 11 : i64} {
  func.func @_branch_conv_kernel(%arg0: i32, %arg1: i32, %arg2: memref<1x8x16x4xbf16, #tpu.memory_space<vmem>>, %arg3: memref<4x128xbf16, #tpu.memory_space<vmem>>, %arg4: memref<1x8x16x128xbf16, #tpu.memory_space<vmem>>, %arg5: memref<1x1x2x128xf32, #tpu.memory_space<vmem>>) attributes {dimension_semantics = [#tpu.dimension_semantics<parallel>, #tpu.dimension_semantics<parallel>], iteration_bounds = array<i64: 2, 2>, scalar_prefetch = 0 : i64, scratch_operands = 0 : i64, tpu.core_type = #tpu.core_type<tc>, window_params = [{transform_indices = @transform_0, window_bounds = array<i64: 1, 8, 16, 4>}, {pipeline_mode = #tpu.pipeline_mode<synchronous>, transform_indices = @transform_1, window_bounds = array<i64: 4, 128>}, {transform_indices = @transform_2, window_bounds = array<i64: 1, 8, 16, 128>}, {transform_indices = @transform_3, window_bounds = array<i64: 1, 1, 2, 128>}]} {
    %c0 = arith.constant 0 : index
    %c0_0 = arith.constant 0 : index
    %c0_1 = arith.constant 0 : index
    %c0_2 = arith.constant 0 : index
    %0 = vector.load %arg2[%c0, %c0_0, %c0_1, %c0_2] : memref<1x8x16x4xbf16, #tpu.memory_space<vmem>>, vector<1x8x16x4xbf16>
    %1 = vector.shape_cast %0 : vector<1x8x16x4xbf16> to vector<8x16x4xbf16>
    %2 = vector.shape_cast %1 : vector<8x16x4xbf16> to vector<128x4xbf16>
    %c0_3 = arith.constant 0 : index
    %c0_4 = arith.constant 0 : index
    %3 = vector.load %arg3[%c0_3, %c0_4] : memref<4x128xbf16, #tpu.memory_space<vmem>>, vector<4x128xbf16>
    %cst = arith.constant dense<0.000000e+00> : vector<128x128xf32>
    %4 = tpu.matmul %2, %3, %cst {dimension_numbers = #tpu.dot_dimension_numbers<[1], [0], [0], [1], [0, 0, 1, 1], [], []>} : vector<128x4xbf16>, vector<4x128xbf16>, vector<128x128xf32> -> vector<128x128xf32>
    %5 = vector.shape_cast %4 : vector<128x128xf32> to vector<8x16x128xf32>
    %6 = arith.truncf %5 : vector<8x16x128xf32> to vector<8x16x128xbf16>
    %c0_5 = arith.constant 0 : index
    %c0_6 = arith.constant 0 : index
    %c0_7 = arith.constant 0 : index
    %c0_8 = arith.constant 0 : index
    %7 = vector.load %arg4[%c0_5, %c0_6, %c0_7, %c0_8] : memref<1x8x16x128xbf16, #tpu.memory_space<vmem>>, vector<1x8x16x128xbf16>
    %8 = vector.shape_cast %7 : vector<1x8x16x128xbf16> to vector<8x16x128xbf16>
    %9 = vector.shape_cast %6 : vector<8x16x128xbf16> to vector<1x8x16x128xbf16>
    tpu.vector_store %arg4[%c0_5, %c0_6, %c0_7, %c0_8], %9 {strides = array<i32>} : memref<1x8x16x128xbf16, #tpu.memory_space<vmem>>, vector<1x8x16x128xbf16>,
    %cst_9 = arith.constant 1.000000e+00 : f32
    %10 = vector.broadcast %cst_9 : f32 to vector<8x128xf32>
    %cst_10 = arith.constant dense<0.000000e+00> : vector<8x128xf32>
    %11 = tpu.matmul %10, %4, %cst_10 {dimension_numbers = #tpu.dot_dimension_numbers<[1], [0], [0], [1], [0, 0, 1, 1], [], []>} : vector<8x128xf32>, vector<128x128xf32>, vector<8x128xf32> -> vector<8x128xf32>
    %12 = vector.extract_strided_slice %11 {offsets = [0, 0], sizes = [1, 128], strides = [1, 1]} : vector<8x128xf32> to vector<1x128xf32>
    %13 = arith.mulf %4, %4 : vector<128x128xf32>
    %cst_11 = arith.constant dense<0.000000e+00> : vector<8x128xf32>
    %14 = tpu.matmul %10, %13, %cst_11 {dimension_numbers = #tpu.dot_dimension_numbers<[1], [0], [0], [1], [0, 0, 1, 1], [], []>} : vector<8x128xf32>, vector<128x128xf32>, vector<8x128xf32> -> vector<8x128xf32>
    %15 = vector.extract_strided_slice %14 {offsets = [0, 0], sizes = [1, 128], strides = [1, 1]} : vector<8x128xf32> to vector<1x128xf32>
    %16 = tpu.concatenate %12, %15 in 0 : vector<1x128xf32>, vector<1x128xf32> -> vector<2x128xf32>
    %c0_12 = arith.constant 0 : index
    %c0_13 = arith.constant 0 : index
    %c0_14 = arith.constant 0 : index
    %c0_15 = arith.constant 0 : index
    %17 = vector.load %arg5[%c0_12, %c0_13, %c0_14, %c0_15] : memref<1x1x2x128xf32, #tpu.memory_space<vmem>>, vector<1x1x2x128xf32>
    %18 = vector.shape_cast %17 : vector<1x1x2x128xf32> to vector<2x128xf32>
    %19 = vector.shape_cast %16 : vector<2x128xf32> to vector<1x1x2x128xf32>
    tpu.vector_store %arg5[%c0_12, %c0_13, %c0_14, %c0_15], %19 {strides = array<i32>} : memref<1x1x2x128xf32, #tpu.memory_space<vmem>>, vector<1x1x2x128xf32>,
    return
  }
  func.func @transform_0(%arg0: i32, %arg1: i32) -> (i32, i32, i32, i32) {
    %c0_i32 = arith.constant 0 : i32
    %c0_i32_0 = arith.constant 0 : i32
    %c0_i32_1 = arith.constant 0 : i32
    return %arg0, %arg1, %c0_i32, %c0_i32_0 : i32, i32, i32, i32
  }
  func.func @transform_1(%arg0: i32, %arg1: i32) -> (i32, i32) {
    %c0_i32 = arith.constant 0 : i32
    %c0_i32_0 = arith.constant 0 : i32
    %c0_i32_1 = arith.constant 0 : i32
    return %c0_i32, %c0_i32_0 : i32, i32
  }
  func.func @transform_2(%arg0: i32, %arg1: i32) -> (i32, i32, i32, i32) {
    %c0_i32 = arith.constant 0 : i32
    %c0_i32_0 = arith.constant 0 : i32
    %c0_i32_1 = arith.constant 0 : i32
    return %arg0, %arg1, %c0_i32, %c0_i32_0 : i32, i32, i32, i32
  }
  func.func @transform_3(%arg0: i32, %arg1: i32) -> (i32, i32, i32, i32) {
    %c0_i32 = arith.constant 0 : i32
    %c0_i32_0 = arith.constant 0 : i32
    %c0_i32_1 = arith.constant 0 : i32
    return %arg0, %arg1, %c0_i32, %c0_i32_0 : i32, i32, i32, i32
  }
}

</mosaic_0001>

<llo_original>
// kernel: tpu_custom_call.1
$region0: #{tpu_custom_call.1}
  #allocation0 [shape = 'u32[]', space=smem, size = 0x4, offset = 0x4, fixed_abs, tag = 'smem constant byte address 0x4 - core index']
  #allocation1 [shape = 'u32[144,128]{1,0:T(1,128)}', space=vmem, size = 0x12000, scoped, tag = 'internal scratch']
  %s0 = inlined_call_operand.vmem [shape: bf16[2,16,16,4], index: 0, kind: input, shape index: {}]
  %s1 = inlined_call_operand.vmem [shape: bf16[4,128], index: 1, kind: input, shape index: {}]
  %s2 = inlined_call_operand.hbm [shape: bf16[2,16,16,128], index: 2, kind: output, shape index: {0}]
  %s3 = inlined_call_operand.hbm [shape: f32[2,2,2,128], index: 3, kind: output, shape index: {1}]
  %4 = xla_tuple %s2, %s3
  %s5 = sld [smem:[#allocation0]]
  $region49: #{tpu_custom_call.1} parent=0
    _
  %s7 = ssub.s32 1, %s5
  %s8 = scalar_select 0, %s7, %s5
  $region1: #{tpu_custom_call.1} parent=0
    #allocation2 [shape = 'u8[65536]{0}', space=vmem, size = 0x10000, scoped, tag = 'output window, operand 0']
    #allocation3 [shape = 's32[2]{0}', space=sflag, size = 0x8, scoped, tag = 'scoped memory for tpu_custom_call.1']
    #allocation4 [shape = 'u8[2048]{0}', space=vmem, size = 0x800, scoped, tag = 'output window, operand 1']
    #allocation5 [shape = 's32[2]{0}', space=sflag, size = 0x8, scoped, tag = 'scoped memory for tpu_custom_call.1']
    %9 = vsyncpa [#allocation3], 0
    %s10 = scalar_lea.sflag [#allocation3], 1
    %11 = vsyncpa %s10, 0
    %12 = vsyncpa [#allocation5], 0
    %s13 = scalar_lea.sflag [#allocation5], 1
    %14 = vsyncpa %s13, 0
    loop: start=0, step=1, limit=6
    $region2: #{tpu_custom_call.1} parent=1 // loop_pre_header
      _
    $region3: #{tpu_custom_call.1} parent=1 // loop_header
      %s16 = sphi 0, %s20
      %p17 = scmp.ge.s32.totalorder %s16, 6
      %s23 = sphi 0, %s35
      %s24 = sphi 0, %s31
      %s25 = sphi 0, %s23
      %s26 = sphi 0, %s24
      %s27 = sphi 0, %s25
      %s28 = sphi 0, %s26
      %s40 = sphi 0, %s42
      %s43 = sphi 0, %s40
      %s44 = sphi 0, %s43
      %s60 = sphi 0, %s44
      %s64 = sphi 0, %s64
      %s66 = sphi 0, %s64
      %s67 = sphi 0, %s66
      %s81 = sphi 0, %s67
      %s89 = sphi 0, %s91
      %s92 = sphi 0, %s89
      %s93 = sphi 0, %s92
      %s109 = sphi 0, %s93
      %s117 = sphi 0, %s119
      %s120 = sphi 0, %s117
      %s121 = sphi 0, %s120
      %s137 = sphi 0, %s121
    $region4: #{tpu_custom_call.1} parent=1 // loop_header_branch
      %19 = sbr.rel (%p17) target = $region8
    $region5: #{tpu_custom_call.1} parent=1 // loop_body
      %s21 = ssub.s32 %s16, 1
      %s22 = ssub.s32 %s16, 2
      %s29 = sadd.s32 1, %s24
      %p30 = scmp.ge.s32.totalorder %s29, 2
      %s31 = scalar_select %p30, 0, %s29
      %s32 = sadd.s32 1, %s23
      %s33 = scalar_select %p30, %s32, %s23
      %p34 = scmp.ge.s32.totalorder %s33, 2
      %s35 = scalar_select %p34, 0, %s33
      %s36 = ssub.s32 %s23, %s35
      %s37 = ssub.s32 %s24, %s31
      %s38 = sor.u32 %s36, %s37
      %p39 = scmp.eq.s32.totalorder %s38, 0
      %s41 = sadd.s32 %s40, 1
      %s42 = scalar_select %p39, %s40, %s41
      %p45 = pneg %p39
      %p46 = scmp.eq.s32.totalorder %s16, 3
      %p47 = por %p45, %p46
      %p48 = scmp.ne.s32.totalorder %s40, %s43
      %p49 = scmp.eq.s32.totalorder %s16, 0
      %p50 = por %p48, %p49
      %p51 = scmp.ne.s32.totalorder %s40, %s43
      %p52 = scmp.eq.s32.totalorder %s21, 3
      %p53 = por %p51, %p52
      %p54 = scmp.ne.s32.totalorder %s43, %s44
      %p55 = scmp.eq.s32.totalorder %s21, 0
      %p56 = por %p54, %p55
      %p57 = scmp.ne.s32.totalorder %s43, %s44
      %p58 = scmp.eq.s32.totalorder %s22, 3
      %p59 = por %p57, %p58
      %p61 = scmp.ne.s32.totalorder %s44, %s60
      %p62 = scmp.eq.s32.totalorder %s22, 0
      %p63 = por %p61, %p62
      %s65 = sadd.s32 %s64, 1
      %p68 = scmp.eq.s32.totalorder %s16, 3
      %p69 = scmp.ne.s32.totalorder %s64, %s66
      %p70 = scmp.eq.s32.totalorder %s16, 0
      %p71 = por %p69, %p70
      %p72 = scmp.ne.s32.totalorder %s64, %s66
      %p73 = scmp.eq.s32.totalorder %s21, 3
      %p74 = por %p72, %p73
      %p75 = scmp.ne.s32.totalorder %s66, %s67
      %p76 = scmp.eq.s32.totalorder %s21, 0
      %p77 = por %p75, %p76
      %p78 = scmp.ne.s32.totalorder %s66, %s67
      %p79 = scmp.eq.s32.totalorder %s22, 3
      %p80 = por %p78, %p79
      %p82 = scmp.ne.s32.totalorder %s67, %s81
      %p83 = scmp.eq.s32.totalorder %s22, 0
      %p84 = por %p82, %p83
      %s85 = ssub.s32 %s23, %s35
      %s86 = ssub.s32 %s24, %s31
      %s87 = sor.u32 %s85, %s86
      %p88 = scmp.eq.s32.totalorder %s87, 0
      %s90 = sadd.s32 %s89, 1
      %s91 = scalar_select %p88, %s89, %s90
      %p94 = pneg %p88
      %p95 = scmp.eq.s32.totalorder %s16, 3
      %p96 = por %p94, %p95
      %p97 = scmp.ne.s32.totalorder %s89, %s92
      %p98 = scmp.eq.s32.totalorder %s16, 0
      %p99 = por %p97, %p98
      %p100 = scmp.ne.s32.totalorder %s89, %s92
      %p101 = scmp.eq.s32.totalorder %s21, 3
      %p102 = por %p100, %p101
      %p103 = scmp.ne.s32.totalorder %s92, %s93
      %p104 = scmp.eq.s32.totalorder %s21, 0
      %p105 = por %p103, %p104
      %p106 = scmp.ne.s32.totalorder %s92, %s93
      %p107 = scmp.eq.s32.totalorder %s22, 3
      %p108 = por %p106, %p107
      %p110 = scmp.ne.s32.totalorder %s93, %s109
      %p111 = scmp.eq.s32.totalorder %s22, 0
      %p112 = por %p110, %p111
      %s113 = ssub.s32 %s23, %s35
      %s114 = ssub.s32 %s24, %s31
      %s115 = sor.u32 %s113, %s114
      %p116 = scmp.eq.s32.totalorder %s115, 0
      %s118 = sadd.s32 %s117, 1
      %s119 = scalar_select %p116, %s117, %s118
      %p122 = pneg %p116
      %p123 = scmp.eq.s32.totalorder %s16, 3
      %p124 = por %p122, %p123
      %p125 = scmp.ne.s32.totalorder %s117, %s120
      %p126 = scmp.eq.s32.totalorder %s16, 0
      %p127 = por %p125, %p126
      %p128 = scmp.ne.s32.totalorder %s117, %s120
      %p129 = scmp.eq.s32.totalorder %s21, 3
      %p130 = por %p128, %p129
      %p131 = scmp.ne.s32.totalorder %s120, %s121
      %p132 = scmp.eq.s32.totalorder %s21, 0
      %p133 = por %p131, %p132
      %p134 = scmp.ne.s32.totalorder %s120, %s121
      %p135 = scmp.eq.s32.totalorder %s22, 3
      %p136 = por %p134, %p135
      %p138 = scmp.ne.s32.totalorder %s121, %s137
      %p139 = scmp.eq.s32.totalorder %s22, 0
      %p140 = por %p138, %p139
      %p141 = scmp.le.s32.totalorder 1, %s16
      %p142 = scmp.lt.s32.totalorder %s16, 5
      %p143 = pnand %p141, %p142
      %p144 = pneg %p143
      // Predicated region
      $region9: #{tpu_custom_call.1} parent=5 // pred_check
        _
      $region10: #{tpu_custom_call.1} parent=5 // pred_check_branch
        %146 = sbr.rel (%p143) target = $region12
      $region11: #{tpu_custom_call.1} parent=5 // pred_region
        %s147 = ssub.s32 %s16, 1
        // Predicated region
        $region13: #{tpu_custom_call.1} parent=11 // pred_check
          %p148 = pneg %p77
        $region14: #{tpu_custom_call.1} parent=11 // pred_check_branch
          %150 = sbr.rel (%p148) target = $region16
        $region15: #{tpu_custom_call.1} parent=11 // pred_region
          _
        $region16: #{tpu_custom_call.1} parent=11 // pred_fallthru
          _
      $region12: #{tpu_custom_call.1} parent=5 // pred_fallthru
        _
      %p151 = scmp.lt.s32.totalorder %s16, 4
      // Predicated region
      $region17: #{tpu_custom_call.1} parent=5 // pred_check
        %p152 = pneg %p151
      $region18: #{tpu_custom_call.1} parent=5 // pred_check_branch
        %154 = sbr.rel (%p152) target = $region20
      $region19: #{tpu_custom_call.1} parent=5 // pred_region
        // Predicated region
        $region21: #{tpu_custom_call.1} parent=19 // pred_check
          %p155 = pneg %p50
        $region22: #{tpu_custom_call.1} parent=19 // pred_check_branch
          %157 = sbr.rel (%p155) target = $region24
        $region23: #{tpu_custom_call.1} parent=19 // pred_region
          %s158 = smul.u32 8, %s24
          %p159 = scmp.lt.s32.totalorder %s23, 1
          %s160 = scalar_select %p159, %s23, 1
          %p161 = scmp.lt.s32.totalorder %s158, 15
          %s162 = scalar_select %p161, %s158, 15
          %s163 = smul.addr %s162, 2
          %s164 = smul.addr %s160, 32
          %s165 = sadd.s32 %s163, %s164
          %s166 = smul.addr %s165, 4
          %s167 = scalar_lea.vmem %s0, %s166
          %s168 = smul.u32 8, %s24
        $region24: #{tpu_custom_call.1} parent=19 // pred_fallthru
          _
      $region20: #{tpu_custom_call.1} parent=5 // pred_fallthru
        _
      %p169 = scmp.le.s32.totalorder 1, %s16
      %p170 = scmp.lt.s32.totalorder %s16, 5
      %p171 = pnand %p169, %p170
      %p172 = pneg %p171
      // Predicated region
      $region25: #{tpu_custom_call.1} parent=5 // pred_check
        _
      $region26: #{tpu_custom_call.1} parent=5 // pred_check_branch
        %174 = sbr.rel (%p171) target = $region28
      $region27: #{tpu_custom_call.1} parent=5 // pred_region
        %s175 = ssub.s32 %s16, 1
        %s176 = smul.u32 8, %s26
        %p177 = scmp.lt.s32.totalorder %s25, 1
        %s178 = scalar_select %p177, %s25, 1
        %p179 = scmp.lt.s32.totalorder %s176, 15
        %s180 = scalar_select %p179, %s176, 15
        %s181 = smul.addr %s180, 2
        %s182 = smul.addr %s178, 32
        %s183 = sadd.s32 %s181, %s182
        %s184 = smul.addr %s183, 4
        %s185 = scalar_lea.vmem %s0, %s184
        %p186 = pneg %p56
        %p187 = pneg %p53
        %p188 = pneg %p77
        %p189 = pneg %p74
        %p190 = pneg %p105
        %p191 = pneg %p102
        %s192 = sand.u32 %s92, 1
        %s193 = scalar_lea.sflag [#allocation3], %s192
        %s194 = sand.u32 %s92, 1
        %s195 = smul.addr %s194, 64
        %s196 = scalar_lea.vmem [#allocation2], %s195
        %p197 = pneg %p133
        %p198 = pneg %p130
        %s199 = sand.u32 %s120, 1
        %s200 = scalar_lea.sflag [#allocation5], %s199
        %s201 = sand.u32 %s120, 1
        %s202 = smul.addr %s201, 2
        %s203 = scalar_lea.vmem [#allocation4], %s202
        %s204 = smul.u32 8, %s26
        %p205 = scmp.lt.s32.totalorder %s25, 1
        %s206 = scalar_select %p205, %s25, 1
        %p207 = scmp.lt.s32.totalorder %s204, 15
        %s208 = scalar_select %p207, %s204, 15
        %s209 = smul.addr %s208, 2
        %s210 = smul.addr %s206, 32
        %s211 = sadd.s32 %s209, %s210
        %s212 = smul.addr %s211, 4
        %s213 = scalar_lea.vmem %s0, %s212
        %s214 = smul.u32 8, %s26
        %s215 = smul.u32 8, %s26
        %v217 = vld [vmem:[%s213] sm:$0xf]
        %v218 = vld [vmem:[%s213 + $0x4] sm:$0xf]
        %v219 = vld [vmem:[%s213 + $0x8] sm:$0xf]
        %v220 = vld [vmem:[%s213 + $0xc] sm:$0xf]
        %v221 = vld [vmem:[%s213 + $0x10] sm:$0xf]
        %v222 = vld [vmem:[%s213 + $0x14] sm:$0xf]
        %v223 = vld [vmem:[%s213 + $0x18] sm:$0xf]
        %v224 = vld [vmem:[%s213 + $0x1c] sm:$0xf]
        %v225 = vld [vmem:[%s213 + $0x20] sm:$0xf]
        %v226 = vld [vmem:[%s213 + $0x24] sm:$0xf]
        %v227 = vld [vmem:[%s213 + $0x28] sm:$0xf]
        %v228 = vld [vmem:[%s213 + $0x2c] sm:$0xf]
        %v229 = vld [vmem:[%s213 + $0x30] sm:$0xf]
        %v230 = vld [vmem:[%s213 + $0x34] sm:$0xf]
        %v231 = vld [vmem:[%s213 + $0x38] sm:$0xf]
        %v232 = vld [vmem:[%s213 + $0x3c] sm:$0xf]
        %v233 = vld [vmem:[%s1] sm:$0x3]
        %v250 = vunpack.c.l.b16 %v217
        %v251 = vunpack.c.l.b16 %v218
        %v252 = vunpack.c.l.b16 %v219
        %v253 = vunpack.c.l.b16 %v220
        %v254 = vunpack.c.l.b16 %v221
        %v255 = vunpack.c.l.b16 %v222
        %v256 = vunpack.c.l.b16 %v223
        %v257 = vunpack.c.l.b16 %v224
        %v258 = vunpack.c.l.b16 %v225
        %v259 = vunpack.c.l.b16 %v226
        %v260 = vunpack.c.l.b16 %v227
        %v261 = vunpack.c.l.b16 %v228
        %v262 = vunpack.c.l.b16 %v229
        %v263 = vunpack.c.l.b16 %v230
        %v264 = vunpack.c.l.b16 %v231
        %v265 = vunpack.c.l.b16 %v232
        %v266 = vpack.c.b16 %v251, %v250
        %v267 = vpack.c.b16 %v253, %v252
        %v268 = vpack.c.b16 %v255, %v254
        %v269 = vpack.c.b16 %v257, %v256
        %v270 = vpack.c.b16 %v259, %v258
        %v271 = vpack.c.b16 %v261, %v260
        %v272 = vpack.c.b16 %v263, %v262
        %v273 = vpack.c.b16 %v265, %v264
        %vm274 = vcmask 31744
        %v276 = vsel %vm274, %v266, 0
        %v279 = vsel %vm274, %v267, 0
        %v282 = vsel %vm274, %v268, 0
        %v285 = vsel %vm274, %v269, 0
        %v288 = vsel %vm274, %v270, 0
        %v291 = vsel %vm274, %v271, 0
        %v294 = vsel %vm274, %v272, 0
        %v297 = vsel %vm274, %v273, 0
        %vm299 = vcmask 1041408
        %v301 = vsel %vm299, %v233, 0
        %303 = vmatprep.subr.bf16.mxu0 0
        %304 = vmatpush1.bf16.msra.mxu0 %v301
        %305 = vmatprep.subr.bf16.mxu0 0
        %306 = vmatpush1.bf16.msra.mxu0 0
        %307 = vmatprep.subr.bf16.mxu0 0
        %308 = vmatpush1.bf16.msra.mxu0 0
        %309 = vmatprep.subr.bf16.mxu0 0
        %310 = vmatpush1.bf16.msra.mxu0 0
        %311 = vmatprep.subr.bf16.mxu0 0
        %312 = vmatpush1.bf16.msra.mxu0 0
        %313 = vmatprep.subr.bf16.mxu0 0
        %314 = vmatpush1.bf16.msra.mxu0 0
        %315 = vmatprep.subr.bf16.mxu0 0
        %316 = vmatpush1.bf16.msra.mxu0 0
        %317 = vmatprep.subr.bf16.mxu0 0
        %318 = vmatpush1.bf16.msra.mxu0 0
        %319 = vmatprep.subr.bf16.mxu0 0
        %320 = vmatpush1.bf16.msra.mxu0 0
        %321 = vmatprep.subr.bf16.mxu0 0
        %322 = vmatpush1.bf16.msra.mxu0 0
        %323 = vmatprep.subr.bf16.mxu0 0
        %324 = vmatpush1.bf16.msra.mxu0 0
        %325 = vmatprep.subr.bf16.mxu0 0
        %326 = vmatpush1.bf16.msra.mxu0 0
        %327 = vmatprep.subr.bf16.mxu0 0
        %328 = vmatpush1.bf16.msra.mxu0 0
        %329 = vmatprep.subr.bf16.mxu0 0
        %330 = vmatpush1.bf16.msra.mxu0 0
        %331 = vmatprep.subr.bf16.mxu0 0
        %332 = vmatpush1.bf16.msra.mxu0 0
        %333 = vmatprep.subr.bf16.mxu0 0
        %334 = vmatpush1.bf16.msra.mxu0 0
        %335 = vmatprep.mubr.bf16.mxu0 0
        %336 = vmatmul.mubr.bf16.gmra.mrb[0].mxu0 %v276
        %v337 = vpop.f32.mrb[0].mxu0
        %v338 = vadd.f32 0.0, %v337
        %v339 = vpop.f32.mrb[0].mxu0
        %v340 = vpop.f32.mrb[0].mxu0
        %v341 = vadd.f32 0.0, %v340
        %v342 = vpop.f32.mrb[0].mxu0
        %343 = vmatprep.mubr.bf16.mxu0 0
        %344 = vmatmul.mubr.bf16.gmra.mrb[0].mxu0 %v279
        %v345 = vpop.f32.mrb[0].mxu0
        %v346 = vadd.f32 0.0, %v345
        %v347 = vpop.f32.mrb[0].mxu0
        %v348 = vpop.f32.mrb[0].mxu0
        %v349 = vadd.f32 0.0, %v348
        %v350 = vpop.f32.mrb[0].mxu0
        %351 = vmatprep.mubr.bf16.mxu0 0
        %352 = vmatmul.mubr.bf16.gmra.mrb[0].mxu0 %v282
        %v353 = vpop.f32.mrb[0].mxu0
        %v354 = vadd.f32 0.0, %v353
        %v355 = vpop.f32.mrb[0].mxu0
        %v356 = vpop.f32.mrb[0].mxu0
        %v357 = vadd.f32 0.0, %v356
        %v358 = vpop.f32.mrb[0].mxu0
        %359 = vmatprep.mubr.bf16.mxu0 0
        %360 = vmatmul.mubr.bf16.gmra.mrb[0].mxu0 %v285
        %v361 = vpop.f32.mrb[0].mxu0
        %v362 = vadd.f32 0.0, %v361
        %v363 = vpop.f32.mrb[0].mxu0
        %v364 = vpop.f32.mrb[0].mxu0
        %v365 = vadd.f32 0.0, %v364
        %v366 = vpop.f32.mrb[0].mxu0
        %367 = vmatprep.mubr.bf16.mxu0 0
        %368 = vmatmul.mubr.bf16.gmra.mrb[0].mxu0 %v288
        %v369 = vpop.f32.mrb[0].mxu0
        %v370 = vadd.f32 0.0, %v369
        %v371 = vpop.f32.mrb[0].mxu0
        %v372 = vpop.f32.mrb[0].mxu0
        %v373 = vadd.f32 0.0, %v372
        %v374 = vpop.f32.mrb[0].mxu0
        %375 = vmatprep.mubr.bf16.mxu0 0
        %376 = vmatmul.mubr.bf16.gmra.mrb[0].mxu0 %v291
        %v377 = vpop.f32.mrb[0].mxu0
        %v378 = vadd.f32 0.0, %v377
        %v379 = vpop.f32.mrb[0].mxu0
        %v380 = vpop.f32.mrb[0].mxu0
        %v381 = vadd.f32 0.0, %v380
        %v382 = vpop.f32.mrb[0].mxu0
        %383 = vmatprep.mubr.bf16.mxu0 0
        %384 = vmatmul.mubr.bf16.gmra.mrb[0].mxu0 %v294
        %v385 = vpop.f32.mrb[0].mxu0
        %v386 = vadd.f32 0.0, %v385
        %v387 = vpop.f32.mrb[0].mxu0
        %v388 = vpop.f32.mrb[0].mxu0
        %v389 = vadd.f32 0.0, %v388
        %v390 = vpop.f32.mrb[0].mxu0
        %391 = vmatprep.mubr.bf16.mxu0 0
        %392 = vmatmul.mubr.bf16.gmra.mrb[0].mxu0 %v297
        %v393 = vpop.f32.mrb[0].mxu0
        %v394 = vadd.f32 0.0, %v393
        %v395 = vpop.f32.mrb[0].mxu0
        %v396 = vpop.f32.mrb[0].mxu0
        %v397 = vadd.f32 0.0, %v396
        %v398 = vpop.f32.mrb[0].mxu0
        %399 = vdwg.mxu0
        %v400 = vpack.c.bf16 %v341, %v338
        %v401 = vpack.c.bf16 %v349, %v346
        %v402 = vpack.c.bf16 %v357, %v354
        %v403 = vpack.c.bf16 %v365, %v362
        %v404 = vpack.c.bf16 %v373, %v370
        %v405 = vpack.c.bf16 %v381, %v378
        %v406 = vpack.c.bf16 %v389, %v386
        %v407 = vpack.c.bf16 %v397, %v394
        %v416 = vunpack.c.l.b16 %v400
        %v417 = vunpack.c.h.b16 %v400
        %v418 = vunpack.c.l.b16 %v401
        %v419 = vunpack.c.h.b16 %v401
        %v420 = vunpack.c.l.b16 %v402
        %v421 = vunpack.c.h.b16 %v402
        %v422 = vunpack.c.l.b16 %v403
        %v423 = vunpack.c.h.b16 %v403
        %v424 = vunpack.c.l.b16 %v404
        %v425 = vunpack.c.h.b16 %v404
        %v426 = vunpack.c.l.b16 %v405
        %v427 = vunpack.c.h.b16 %v405
        %v428 = vunpack.c.l.b16 %v406
        %v429 = vunpack.c.h.b16 %v406
        %v430 = vunpack.c.l.b16 %v407
        %v431 = vunpack.c.h.b16 %v407
        %v432 = vpack.c.b16 %v416, %v416
        %v433 = vpack.c.b16 %v417, %v417
        %v434 = vpack.c.b16 %v418, %v418
        %v435 = vpack.c.b16 %v419, %v419
        %v436 = vpack.c.b16 %v420, %v420
        %v437 = vpack.c.b16 %v421, %v421
        %v438 = vpack.c.b16 %v422, %v422
        %v439 = vpack.c.b16 %v423, %v423
        %v440 = vpack.c.b16 %v424, %v424
        %v441 = vpack.c.b16 %v425, %v425
        %v442 = vpack.c.b16 %v426, %v426
        %v443 = vpack.c.b16 %v427, %v427
        %v444 = vpack.c.b16 %v428, %v428
        %v445 = vpack.c.b16 %v429, %v429
        %v446 = vpack.c.b16 %v430, %v430
        %v447 = vpack.c.b16 %v431, %v431
        %464 = vst [vmem:[%s196] sm:$0xf] %v432
        %465 = vst [vmem:[%s196 + $0x4] sm:$0xf] %v433
        %466 = vst [vmem:[%s196 + $0x8] sm:$0xf] %v434
        %467 = vst [vmem:[%s196 + $0xc] sm:$0xf] %v435
        %468 = vst [vmem:[%s196 + $0x10] sm:$0xf] %v436
        %469 = vst [vmem:[%s196 + $0x14] sm:$0xf] %v437
        %470 = vst [vmem:[%s196 + $0x18] sm:$0xf] %v438
        %471 = vst [vmem:[%s196 + $0x1c] sm:$0xf] %v439
        %472 = vst [vmem:[%s196 + $0x20] sm:$0xf] %v440
        %473 = vst [vmem:[%s196 + $0x24] sm:$0xf] %v441
        %474 = vst [vmem:[%s196 + $0x28] sm:$0xf] %v442
        %475 = vst [vmem:[%s196 + $0x2c] sm:$0xf] %v443
        %476 = vst [vmem:[%s196 + $0x30] sm:$0xf] %v444
        %477 = vst [vmem:[%s196 + $0x34] sm:$0xf] %v445
        %478 = vst [vmem:[%s196 + $0x38] sm:$0xf] %v446
        %479 = vst [vmem:[%s196 + $0x3c] sm:$0xf] %v447
        %480 = vmatprep.subr.mxu0 0.0
        %481 = vmatpush1.msra.mxu0 %v338
        %482 = vmatprep.subr.mxu0 0.0
        %483 = vmatpush1.msra.mxu0 %v341
        %484 = vmatprep.subr.mxu0 0.0
        %485 = vmatpush1.msra.mxu0 %v346
        %486 = vmatprep.subr.mxu0 0.0
        %487 = vmatpush1.msra.mxu0 %v349
        %488 = vmatprep.subr.mxu0 0.0
        %489 = vmatpush1.msra.mxu0 %v354
        %490 = vmatprep.subr.mxu0 0.0
        %491 = vmatpush1.msra.mxu0 %v357
        %492 = vmatprep.subr.mxu0 0.0
        %493 = vmatpush1.msra.mxu0 %v362
        %494 = vmatprep.subr.mxu0 0.0
        %495 = vmatpush1.msra.mxu0 %v365
        %496 = vmatprep.subr.mxu0 0.0
        %497 = vmatpush1.msra.mxu0 %v370
        %498 = vmatprep.subr.mxu0 0.0
        %499 = vmatpush1.msra.mxu0 %v373
        %500 = vmatprep.subr.mxu0 0.0
        %501 = vmatpush1.msra.mxu0 %v378
        %502 = vmatprep.subr.mxu0 0.0
        %503 = vmatpush1.msra.mxu0 %v381
        %504 = vmatprep.subr.mxu0 0.0
        %505 = vmatpush1.msra.mxu0 %v386
        %506 = vmatprep.subr.mxu0 0.0
        %507 = vmatpush1.msra.mxu0 %v389
        %508 = vmatprep.subr.mxu0 0.0
        %509 = vmatpush1.msra.mxu0 %v394
        %510 = vmatprep.subr.mxu0 0.0
        %511 = vmatpush1.msra.mxu0 %v397
        %512 = vmatprep.subr.mxu0 0.0
        %513 = vmatpush1.msra.mxu0 0.0
        %514 = vmatprep.subr.mxu0 0.0
        %515 = vmatpush1.msra.mxu0 0.0
        %516 = vmatprep.subr.mxu0 0.0
        %517 = vmatpush1.msra.mxu0 0.0
        %518 = vmatprep.subr.mxu0 0.0
        %519 = vmatpush1.msra.mxu0 0.0
        %520 = vmatprep.subr.mxu0 0.0
        %521 = vmatpush1.msra.mxu0 0.0
        %522 = vmatprep.subr.mxu0 0.0
        %523 = vmatpush1.msra.mxu0 0.0
        %524 = vmatprep.subr.mxu0 0.0
        %525 = vmatpush1.msra.mxu0 0.0
        %526 = vmatprep.subr.mxu0 0.0
        %527 = vmatpush1.msra.mxu0 0.0
        %528 = vmatprep.subr.mxu0 0.0
        %529 = vmatpush1.msra.mxu0 0.0
        %530 = vmatprep.subr.mxu0 0.0
        %531 = vmatpush1.msra.mxu0 0.0
        %532 = vmatprep.subr.mxu0 0.0
        %533 = vmatpush1.msra.mxu0 0.0
        %534 = vmatprep.subr.mxu0 0.0
        %535 = vmatpush1.msra.mxu0 0.0
        %536 = vmatprep.subr.mxu0 0.0
        %537 = vmatpush1.msra.mxu0 0.0
        %538 = vmatprep.subr.mxu0 0.0
        %539 = vmatpush1.msra.mxu0 0.0
        %540 = vmatprep.subr.mxu0 0.0
        %541 = vmatpush1.msra.mxu0 0.0
        %542 = vmatprep.subr.mxu0 0.0
        %543 = vmatpush1.msra.mxu0 0.0
        %544 = vmatprep.mubr.f32.mxu0 0.0
        %545 = vmatmul.mubr.f32.gmra.mrb[0].mxu0 1.0
        %v546 = vpop.f32.mrb[0].mxu0
        %v547 = vadd.f32 0.0, %v546
        %v548 = vpop.f32.mrb[0].mxu0
        %549 = vdwg.mxu0
        %v550 = vmul.f32 %v338, %v338
        %v551 = vmul.f32 %v341, %v341
        %v552 = vmul.f32 %v346, %v346
        %v553 = vmul.f32 %v349, %v349
        %v554 = vmul.f32 %v354, %v354
        %v555 = vmul.f32 %v357, %v357
        %v556 = vmul.f32 %v362, %v362
        %v557 = vmul.f32 %v365, %v365
        %v558 = vmul.f32 %v370, %v370
        %v559 = vmul.f32 %v373, %v373
        %v560 = vmul.f32 %v378, %v378
        %v561 = vmul.f32 %v381, %v381
        %v562 = vmul.f32 %v386, %v386
        %v563 = vmul.f32 %v389, %v389
        %v564 = vmul.f32 %v394, %v394
        %v565 = vmul.f32 %v397, %v397
        %566 = vmatprep.subr.mxu0 0.0
        %567 = vmatpush1.msra.mxu0 %v550
        %568 = vmatprep.subr.mxu0 0.0
        %569 = vmatpush1.msra.mxu0 %v551
        %570 = vmatprep.subr.mxu0 0.0
        %571 = vmatpush1.msra.mxu0 %v552
        %572 = vmatprep.subr.mxu0 0.0
        %573 = vmatpush1.msra.mxu0 %v553
        %574 = vmatprep.subr.mxu0 0.0
        %575 = vmatpush1.msra.mxu0 %v554
        %576 = vmatprep.subr.mxu0 0.0
        %577 = vmatpush1.msra.mxu0 %v555
        %578 = vmatprep.subr.mxu0 0.0
        %579 = vmatpush1.msra.mxu0 %v556
        %580 = vmatprep.subr.mxu0 0.0
        %581 = vmatpush1.msra.mxu0 %v557
        %582 = vmatprep.subr.mxu0 0.0
        %583 = vmatpush1.msra.mxu0 %v558
        %584 = vmatprep.subr.mxu0 0.0
        %585 = vmatpush1.msra.mxu0 %v559
        %586 = vmatprep.subr.mxu0 0.0
        %587 = vmatpush1.msra.mxu0 %v560
        %588 = vmatprep.subr.mxu0 0.0
        %589 = vmatpush1.msra.mxu0 %v561
        %590 = vmatprep.subr.mxu0 0.0
        %591 = vmatpush1.msra.mxu0 %v562
        %592 = vmatprep.subr.mxu0 0.0
        %593 = vmatpush1.msra.mxu0 %v563
        %594 = vmatprep.subr.mxu0 0.0
        %595 = vmatpush1.msra.mxu0 %v564
        %596 = vmatprep.subr.mxu0 0.0
        %597 = vmatpush1.msra.mxu0 %v565
        %598 = vmatprep.subr.mxu0 0.0
        %599 = vmatpush1.msra.mxu0 0.0
        %600 = vmatprep.subr.mxu0 0.0
        %601 = vmatpush1.msra.mxu0 0.0
        %602 = vmatprep.subr.mxu0 0.0
        %603 = vmatpush1.msra.mxu0 0.0
        %604 = vmatprep.subr.mxu0 0.0
        %605 = vmatpush1.msra.mxu0 0.0
        %606 = vmatprep.subr.mxu0 0.0
        %607 = vmatpush1.msra.mxu0 0.0
        %608 = vmatprep.subr.mxu0 0.0
        %609 = vmatpush1.msra.mxu0 0.0
        %610 = vmatprep.subr.mxu0 0.0
        %611 = vmatpush1.msra.mxu0 0.0
        %612 = vmatprep.subr.mxu0 0.0
        %613 = vmatpush1.msra.mxu0 0.0
        %614 = vmatprep.subr.mxu0 0.0
        %615 = vmatpush1.msra.mxu0 0.0
        %616 = vmatprep.subr.mxu0 0.0
        %617 = vmatpush1.msra.mxu0 0.0
        %618 = vmatprep.subr.mxu0 0.0
        %619 = vmatpush1.msra.mxu0 0.0
        %620 = vmatprep.subr.mxu0 0.0
        %621 = vmatpush1.msra.mxu0 0.0
        %622 = vmatprep.subr.mxu0 0.0
        %623 = vmatpush1.msra.mxu0 0.0
        %624 = vmatprep.subr.mxu0 0.0
        %625 = vmatpush1.msra.mxu0 0.0
        %626 = vmatprep.subr.mxu0 0.0
        %627 = vmatpush1.msra.mxu0 0.0
        %628 = vmatprep.subr.mxu0 0.0
        %629 = vmatpush1.msra.mxu0 0.0
        %630 = vmatprep.mubr.f32.mxu0 0.0
        %631 = vmatmul.mubr.f32.gmra.mrb[0].mxu0 1.0
        %v632 = vpop.f32.mrb[0].mxu0
        %v633 = vadd.f32 0.0, %v632
        %v634 = vpop.f32.mrb[0].mxu0
        %635 = vdwg.mxu0
        %v637 = vrot.slane %v633, 7
        %vm639 = vcmask 1040384
        %v640 = vsel %vm639, %v547, %v637
        %641 = vst [vmem:[%s203] sm:$0x3] %v640
        %s642 = sand.u32 %s92, 1
        %s643 = scalar_lea.sflag [#allocation3], %s642
        %s644 = sand.u32 %s92, 1
        %s645 = smul.addr %s644, 64
        %s646 = scalar_lea.vmem [#allocation2], %s645
        %s647 = sand.u32 %s120, 1
        %s648 = scalar_lea.sflag [#allocation5], %s647
        %s649 = sand.u32 %s120, 1
        %s650 = smul.addr %s649, 2
        %s651 = scalar_lea.vmem [#allocation4], %s650
        // Predicated region
        $region29: #{tpu_custom_call.1} parent=27 // pred_check
          %p652 = pneg %p102
        $region30: #{tpu_custom_call.1} parent=27 // pred_check_branch
          %654 = sbr.rel (%p652) target = $region32
        $region31: #{tpu_custom_call.1} parent=27 // pred_region
          %s655 = smul.u32 8, %s26
          %s657 = ssub.s32 1024, 1024
          %658 = vsyncadd %s643, %s657
          %s659 = smul.addr %s655, 2
          %s660 = smul.addr %s25, 32
          %s661 = sadd.s32 %s659, %s660
          %s662 = smul.addr %s661, 64
          %s663 = scalar_lea.hbm %s2, %s662
          %s664 = sshll.u32 %s646, 4
          %s665 = int_to_ptr.vmem [resolvable:$true] %s664
          %670 = dma.vmem_to_hbm [thread:$0]  %s665, 1024, %s663, %s643, 64, 64, 4
        $region32: #{tpu_custom_call.1} parent=27 // pred_fallthru
          _
        // Predicated region
        $region33: #{tpu_custom_call.1} parent=27 // pred_check
          %p671 = pneg %p130
        $region34: #{tpu_custom_call.1} parent=27 // pred_check_branch
          %673 = sbr.rel (%p671) target = $region36
        $region35: #{tpu_custom_call.1} parent=27 // pred_region
          %s675 = ssub.s32 32, 32
          %676 = vsyncadd %s648, %s675
          %s677 = smul.addr %s25, 2
          %s678 = sadd.s32 %s26, %s677
          %s679 = smul.addr %s678, 32
          %s680 = scalar_lea.hbm %s3, %s679
          %s682 = sshll.u32 %s651, 4
          %s683 = int_to_ptr.vmem [resolvable:$true] %s682
          %685 = dma.vmem_to_hbm [thread:$0]  %s683, 32, %s680, %s648
        $region36: #{tpu_custom_call.1} parent=27 // pred_fallthru
          _
      $region28: #{tpu_custom_call.1} parent=5 // pred_fallthru
        _
      %p686 = scmp.le.s32.totalorder 2, %s16
      // Predicated region
      $region37: #{tpu_custom_call.1} parent=5 // pred_check
        %p687 = pneg %p686
      $region38: #{tpu_custom_call.1} parent=5 // pred_check_branch
        %689 = sbr.rel (%p687) target = $region40
      $region39: #{tpu_custom_call.1} parent=5 // pred_region
        %s690 = ssub.s32 %s16, 2
        // Predicated region
        $region41: #{tpu_custom_call.1} parent=39 // pred_check
          %p691 = pneg %p108
        $region42: #{tpu_custom_call.1} parent=39 // pred_check_branch
          %693 = sbr.rel (%p691) target = $region44
        $region43: #{tpu_custom_call.1} parent=39 // pred_region
          %s694 = sand.u32 %s93, 1
          %s695 = scalar_lea.sflag [#allocation3], %s694
          %s696 = sand.u32 %s93, 1
          %s697 = smul.addr %s696, 64
          %s698 = scalar_lea.vmem [#allocation2], %s697
          %699 = dma.done %s695, 1024
        $region44: #{tpu_custom_call.1} parent=39 // pred_fallthru
          _
        // Predicated region
        $region45: #{tpu_custom_call.1} parent=39 // pred_check
          %p700 = pneg %p136
        $region46: #{tpu_custom_call.1} parent=39 // pred_check_branch
          %702 = sbr.rel (%p700) target = $region48
        $region47: #{tpu_custom_call.1} parent=39 // pred_region
          %s703 = sand.u32 %s121, 1
          %s704 = scalar_lea.sflag [#allocation5], %s703
          %s705 = sand.u32 %s121, 1
          %s706 = smul.addr %s705, 2
          %s707 = scalar_lea.vmem [#allocation4], %s706
          %708 = dma.done %s704, 32
        $region48: #{tpu_custom_call.1} parent=39 // pred_fallthru
          _
      $region40: #{tpu_custom_call.1} parent=5 // pred_fallthru
        _
    $region6: #{tpu_custom_call.1} parent=1 // loop_footer
      %s20 = sadd.s32 1, %s16
    $region7: #{tpu_custom_call.1} parent=1 // loop_footer_branch
      %15 = sbr.rel target = $region3
    $region8: #{tpu_custom_call.1} parent=1 // loop_exit
      _
    %709 = vsyncpa [#allocation3], 1
    %s710 = scalar_lea.sflag [#allocation3], 1
    %711 = vsyncpa %s710, 1
    %712 = vsyncpa [#allocation5], 1
    %s713 = scalar_lea.sflag [#allocation5], 1
    %714 = vsyncpa %s713, 1

</llo_original>
